<compile_context>
chip_gen: v7x
topology: tpu7x:2x2x1
jax: 0.10.0
libtpu: 0.0.40
codegen_flags: <defaults>
</compile_context>

<pallas_src>
import functools

import jax
import jax.numpy as jnp
from jax import lax
from jax.experimental import pallas as pl
from jax.experimental.pallas import tpu as pltpu


def mha_head_kernel(q_ref, k_ref, v_ref,
                    wq_ref, bq_ref, wk_ref, bk_ref, wv_ref, bv_ref,
                    wm_ref, bm_ref,
                    o_ref, acc_ref):
    """One (batch, query-tile, head) grid step.

    q_ref:  (1, TQ, D) bf16   channels-last query activations
    k_ref:  (1, M,  D) bf16   channels-last key activations
    v_ref:  (1, M,  D) bf16   channels-last value activations
    w*_ref: (1, D, dh) bf16   per-head projection weight, pre-transposed
                              (1/sqrt(dh) already folded into wq)
    b*_ref: (1, 1, dh) f32    per-head projection bias (scaled for q)
    wm_ref: (1, dh, D) bf16   per-head slice of merge weight, pre-transposed
    bm_ref: (1, D)     f32    merge bias
    o_ref:  (1, TQ, D)        output block (revisited across the head axis)
    acc_ref:(TQ, D)    f32    VMEM accumulator for the merge sum over heads
    """
    h = pl.program_id(2)

    @pl.when(h == 0)
    def _init():
        acc_ref[...] = jnp.zeros_like(acc_ref)

    x_q = q_ref[0]                       # (TQ, D)
    x_k = k_ref[0]                       # (M, D)
    x_v = v_ref[0]                       # (M, D)

    # Per-head Conv1d(kernel_size=1) projections: bf16 MXU, f32 accumulation.
    q_h = jnp.dot(x_q, wq_ref[0], preferred_element_type=jnp.float32) + bq_ref[0]
    k_h = jnp.dot(x_k, wk_ref[0], preferred_element_type=jnp.float32) + bk_ref[0]
    v_h = jnp.dot(x_v, wv_ref[0], preferred_element_type=jnp.float32) + bv_ref[0]

    # Scores (TQ, M): NT contraction over head_dim (scale already in wq/bq).
    s = lax.dot_general(q_h.astype(jnp.bfloat16), k_h.astype(jnp.bfloat16),
                        dimension_numbers=(((1,), (1,)), ((), ())),
                        preferred_element_type=jnp.float32)

    # Numerically stable softmax over keys, kept in f32; reciprocal on EUP.
    s = s - jnp.max(s, axis=-1, keepdims=True)
    p = jnp.exp(s)
    p = p * pl.reciprocal(jnp.sum(p, axis=-1, keepdims=True), approx=True)

    # Attention output for this head: (TQ, dh)
    o_h = jnp.dot(p.astype(jnp.bfloat16), v_h.astype(jnp.bfloat16),
                  preferred_element_type=jnp.float32)

    # This head's contribution to the merge Conv1d, accumulated over heads.
    acc_ref[...] += jnp.dot(o_h.astype(jnp.bfloat16), wm_ref[0],
                            preferred_element_type=jnp.float32)   # (TQ, D)

    @pl.when(h == pl.num_programs(2) - 1)
    def _finalize():
        o_ref[0] = (acc_ref[...] + bm_ref[...]).astype(o_ref.dtype)


@functools.partial(jax.jit, static_argnums=(4,))
def multi_headed_attention(query, key, value, params, num_heads):
    """query: (B, d_model, N); key/value: (B, d_model, M) (PyTorch NCL)."""
    B, D, N = query.shape
    M = key.shape[2]
    H = num_heads
    assert D % H == 0
    dh = D // H
    scale = 1.0 / (dh ** 0.5)

    # PyTorch `.view(B, dim, H, -1)` maps output channel c = d*H + h to
    # (head h, feature d).  Build per-head, already-transposed weights so the
    # kernel never transposes, lane-slices, or concatenates:
    #   wT_heads[h, i, d]   = W[d*H + h, i]
    #   wmT_heads[h, d, o]  = Wm[o, d*H + h]
    def per_head_T(w):                                     # (D, D) -> (H, D, dh)
        return w.reshape(dh, H, D).transpose(1, 2, 0)

    def per_head_b(b):                                     # (D,) -> (H, 1, dh)
        return b.reshape(dh, H).T.reshape(H, 1, dh)

    wqT = (per_head_T(params['wq']) * scale).astype(jnp.bfloat16)  # scale folded in
    bq = (per_head_b(params['bq']) * scale).astype(jnp.float32)
    wkT = per_head_T(params['wk']).astype(jnp.bfloat16)
    bk = per_head_b(params['bk']).astype(jnp.float32)
    wvT = per_head_T(params['wv']).astype(jnp.bfloat16)
    bv = per_head_b(params['bv']).astype(jnp.float32)
    wmT = params['wm'].reshape(D, dh, H).transpose(2, 1, 0).astype(jnp.bfloat16)
    bm = params['bm'].reshape(1, D).astype(jnp.float32)

    # Channels-last bf16 activations (transposes + pallas_call in one jit).
    q = jnp.transpose(query, (0, 2, 1)).astype(jnp.bfloat16)   # (B, N, D)
    k = jnp.transpose(key, (0, 2, 1)).astype(jnp.bfloat16)     # (B, M, D)
    v = jnp.transpose(value, (0, 2, 1)).astype(jnp.bfloat16)   # (B, M, D)

    # Query tile: large enough to feed the MXU / amortize per-step overhead,
    # bounded so the (TQ, M) f32 score tile stays well inside VMEM on v7x.
    TQ = min(N, 256)
    n_q = pl.cdiv(N, TQ)

    q_spec = pl.BlockSpec((1, TQ, D), lambda b, i, h: (b, i, 0))
    kv_spec = pl.BlockSpec((1, M, D), lambda b, i, h: (b, 0, 0))
    w_spec = pl.BlockSpec((1, D, dh), lambda b, i, h: (h, 0, 0))
    b_spec = pl.BlockSpec((1, 1, dh), lambda b, i, h: (h, 0, 0))
    wm_spec = pl.BlockSpec((1, dh, D), lambda b, i, h: (h, 0, 0))
    bm_spec = pl.BlockSpec((1, D), lambda b, i, h: (0, 0))
    out_spec = pl.BlockSpec((1, TQ, D), lambda b, i, h: (b, i, 0))

    out = pl.pallas_call(
        mha_head_kernel,
        out_shape=jax.ShapeDtypeStruct((B, N, D), query.dtype),
        grid=(B, n_q, H),
        in_specs=[q_spec, kv_spec, kv_spec,
                  w_spec, b_spec, w_spec, b_spec, w_spec, b_spec,
                  wm_spec, bm_spec],
        out_specs=out_spec,
        scratch_shapes=[pltpu.VMEM((TQ, D), jnp.float32)],
        compiler_params=pltpu.CompilerParams(
            dimension_semantics=("parallel", "parallel", "arbitrary"),
            vmem_limit_bytes=32 * 1024 * 1024),
    )(q, k, v, wqT, bq, wkT, bk, wvT, bv, wmT, bm)

    return jnp.transpose(out, (0, 2, 1))                   # back to (B, d_model, N)


def reference(query, key, value, params, num_heads):
    """Pure-JAX f32 mirror of the PyTorch forward (for verification)."""
    B, D, N = query.shape
    dim = D // num_heads

    def proj(x, w, b):
        return jnp.einsum('oc,bcn->bon', w, x) + b[None, :, None]

    def split(x):
        b, d, n = x.shape
        return x.reshape(b, dim, num_heads, n)

    q = split(proj(query, params['wq'], params['bq']))
    k = split(proj(key, params['wk'], params['bk']))
    v = split(proj(value, params['wv'], params['bv']))
    scores = jnp.einsum('bdhn,bdhm->bhnm', q, k) / dim ** 0.5
    prob = jax.nn.softmax(scores, axis=-1)
    x = jnp.einsum('bhnm,bdhm->bdhn', prob, v).reshape(B, D, N)
    return proj(x, params['wm'], params['bm'])


if __name__ == "__main__":
    B, D, N, M = 2, 32, 8, 16        # batch, d_model, query len, key/value len
    num_heads = 4

    root = jax.random.PRNGKey(0)
    keys = jax.random.split(root, 12)
    bound = 1.0 / (D ** 0.5)          # mimic Conv1d default init scale

    def u(k, shape):
        return jax.random.uniform(k, shape, jnp.float32, -bound, bound)

    params = {
        'wq': u(keys[0], (D, D)), 'bq': u(keys[1], (D,)),
        'wk': u(keys[2], (D, D)), 'bk': u(keys[3], (D,)),
        'wv': u(keys[4], (D, D)), 'bv': u(keys[5], (D,)),
        'wm': u(keys[6], (D, D)), 'bm': u(keys[7], (D,)),
    }
    query = jax.random.normal(keys[8], (B, D, N), jnp.float32)
    key_t = jax.random.normal(keys[9], (B, D, M), jnp.float32)
    value = jax.random.normal(keys[10], (B, D, M), jnp.float32)

    out = multi_headed_attention(query, key_t, value, params, num_heads)
    out = jax.block_until_ready(out)

    ref = reference(query, key_t, value, params, num_heads)
    assert out.shape == (B, D, N)
    max_err = float(jnp.max(jnp.abs(out - ref)))
    # bf16 MXU operands (f32 accumulation / f32 softmax) -> bf16-level tolerance.
    assert jnp.allclose(out, ref, atol=2e-2, rtol=2e-2), max_err

    print("KERNEL_OK")
</pallas_src>

<mosaic_0001>
module attributes {stable_mosaic.version = 11 : i64} {
  func.func @mha_head_kernel(%arg0: i32, %arg1: i32, %arg2: i32, %arg3: memref<1x8x32xbf16, #tpu.memory_space<vmem>>, %arg4: memref<1x16x32xbf16, #tpu.memory_space<vmem>>, %arg5: memref<1x16x32xbf16, #tpu.memory_space<vmem>>, %arg6: memref<1x32x8xbf16, #tpu.memory_space<vmem>>, %arg7: memref<1x1x8xf32, #tpu.memory_space<vmem>>, %arg8: memref<1x32x8xbf16, #tpu.memory_space<vmem>>, %arg9: memref<1x1x8xf32, #tpu.memory_space<vmem>>, %arg10: memref<1x32x8xbf16, #tpu.memory_space<vmem>>, %arg11: memref<1x1x8xf32, #tpu.memory_space<vmem>>, %arg12: memref<1x8x32xbf16, #tpu.memory_space<vmem>>, %arg13: memref<1x32xf32, #tpu.memory_space<vmem>>, %arg14: memref<1x8x32xf32, #tpu.memory_space<vmem>>, %arg15: memref<8x32xf32, #tpu.memory_space<vmem>>) attributes {dimension_semantics = [#tpu.dimension_semantics<parallel>, #tpu.dimension_semantics<parallel>, #tpu.dimension_semantics<arbitrary>], iteration_bounds = array<i64: 2, 1, 4>, scalar_prefetch = 0 : i64, scratch_operands = 1 : i64, tpu.core_type = #tpu.core_type<tc>, window_params = [{transform_indices = @transform_0, window_bounds = array<i64: 1, 8, 32>}, {transform_indices = @transform_1, window_bounds = array<i64: 1, 16, 32>}, {transform_indices = @transform_2, window_bounds = array<i64: 1, 16, 32>}, {transform_indices = @transform_3, window_bounds = array<i64: 1, 32, 8>}, {transform_indices = @transform_4, window_bounds = array<i64: 1, 1, 8>}, {transform_indices = @transform_5, window_bounds = array<i64: 1, 32, 8>}, {transform_indices = @transform_6, window_bounds = array<i64: 1, 1, 8>}, {transform_indices = @transform_7, window_bounds = array<i64: 1, 32, 8>}, {transform_indices = @transform_8, window_bounds = array<i64: 1, 1, 8>}, {transform_indices = @transform_9, window_bounds = array<i64: 1, 8, 32>}, {pipeline_mode = #tpu.pipeline_mode<synchronous>, transform_indices = @transform_10, window_bounds = array<i64: 1, 32>}, {transform_indices = @transform_11, window_bounds = array<i64: 1, 8, 32>}]} {
    %c0_i32 = arith.constant 0 : i32
    %0 = arith.cmpi eq, %arg2, %c0_i32 : i32
    %1 = arith.extui %0 : i1 to i32
    %c0_i32_0 = arith.constant 0 : i32
    %2 = arith.cmpi ne, %1, %c0_i32_0 : i32
    scf.if %2 {
      %cst_42 = arith.constant 0.000000e+00 : f32
      %56 = vector.broadcast %cst_42 : f32 to vector<8x32xf32>
      %c0_43 = arith.constant 0 : index
      %c0_44 = arith.constant 0 : index
      %57 = vector.load %arg15[%c0_43, %c0_44] : memref<8x32xf32, #tpu.memory_space<vmem>>, vector<8x32xf32>
      tpu.vector_store %arg15[%c0_43, %c0_44], %56 {strides = array<i32>} : memref<8x32xf32, #tpu.memory_space<vmem>>, vector<8x32xf32>,
    } else {
    }
    %c0 = arith.constant 0 : index
    %c0_1 = arith.constant 0 : index
    %c0_2 = arith.constant 0 : index
    %3 = vector.load %arg3[%c0, %c0_1, %c0_2] : memref<1x8x32xbf16, #tpu.memory_space<vmem>>, vector<1x8x32xbf16>
    %4 = vector.shape_cast %3 : vector<1x8x32xbf16> to vector<8x32xbf16>
    %c0_3 = arith.constant 0 : index
    %c0_4 = arith.constant 0 : index
    %c0_5 = arith.constant 0 : index
    %5 = vector.load %arg4[%c0_3, %c0_4, %c0_5] : memref<1x16x32xbf16, #tpu.memory_space<vmem>>, vector<1x16x32xbf16>
    %6 = vector.shape_cast %5 : vector<1x16x32xbf16> to vector<16x32xbf16>
    %c0_6 = arith.constant 0 : index
    %c0_7 = arith.constant 0 : index
    %c0_8 = arith.constant 0 : index
    %7 = vector.load %arg5[%c0_6, %c0_7, %c0_8] : memref<1x16x32xbf16, #tpu.memory_space<vmem>>, vector<1x16x32xbf16>
    %8 = vector.shape_cast %7 : vector<1x16x32xbf16> to vector<16x32xbf16>
    %c0_9 = arith.constant 0 : index
    %c0_10 = arith.constant 0 : index
    %c0_11 = arith.constant 0 : index
    %9 = vector.load %arg6[%c0_9, %c0_10, %c0_11] : memref<1x32x8xbf16, #tpu.memory_space<vmem>>, vector<1x32x8xbf16>
    %10 = vector.shape_cast %9 : vector<1x32x8xbf16> to vector<32x8xbf16>
    %cst = arith.constant dense<0.000000e+00> : vector<8x8xf32>
    %11 = tpu.matmul %4, %10, %cst {dimension_numbers = #tpu.dot_dimension_numbers<[1], [0], [0], [1], [0, 0, 1, 1], [], []>} : vector<8x32xbf16>, vector<32x8xbf16>, vector<8x8xf32> -> vector<8x8xf32>
    %c0_12 = arith.constant 0 : index
    %c0_13 = arith.constant 0 : index
    %c0_14 = arith.constant 0 : index
    %12 = vector.load %arg7[%c0_12, %c0_13, %c0_14] : memref<1x1x8xf32, #tpu.memory_space<vmem>>, vector<1x1x8xf32>
    %13 = vector.shape_cast %12 : vector<1x1x8xf32> to vector<1x8xf32>
    %14 = vector.broadcast %13 : vector<1x8xf32> to vector<8x8xf32>
    %15 = arith.addf %11, %14 : vector<8x8xf32>
    %c0_15 = arith.constant 0 : index
    %c0_16 = arith.constant 0 : index
    %c0_17 = arith.constant 0 : index
    %16 = vector.load %arg8[%c0_15, %c0_16, %c0_17] : memref<1x32x8xbf16, #tpu.memory_space<vmem>>, vector<1x32x8xbf16>
    %17 = vector.shape_cast %16 : vector<1x32x8xbf16> to vector<32x8xbf16>
    %cst_18 = arith.constant dense<0.000000e+00> : vector<16x8xf32>
    %18 = tpu.matmul %6, %17, %cst_18 {dimension_numbers = #tpu.dot_dimension_numbers<[1], [0], [0], [1], [0, 0, 1, 1], [], []>} : vector<16x32xbf16>, vector<32x8xbf16>, vector<16x8xf32> -> vector<16x8xf32>
    %c0_19 = arith.constant 0 : index
    %c0_20 = arith.constant 0 : index
    %c0_21 = arith.constant 0 : index
    %19 = vector.load %arg9[%c0_19, %c0_20, %c0_21] : memref<1x1x8xf32, #tpu.memory_space<vmem>>, vector<1x1x8xf32>
    %20 = vector.shape_cast %19 : vector<1x1x8xf32> to vector<1x8xf32>
    %21 = vector.broadcast %20 : vector<1x8xf32> to vector<16x8xf32>
    %22 = arith.addf %18, %21 : vector<16x8xf32>
    %c0_22 = arith.constant 0 : index
    %c0_23 = arith.constant 0 : index
    %c0_24 = arith.constant 0 : index
    %23 = vector.load %arg10[%c0_22, %c0_23, %c0_24] : memref<1x32x8xbf16, #tpu.memory_space<vmem>>, vector<1x32x8xbf16>
    %24 = vector.shape_cast %23 : vector<1x32x8xbf16> to vector<32x8xbf16>
    %cst_25 = arith.constant dense<0.000000e+00> : vector<16x8xf32>
    %25 = tpu.matmul %8, %24, %cst_25 {dimension_numbers = #tpu.dot_dimension_numbers<[1], [0], [0], [1], [0, 0, 1, 1], [], []>} : vector<16x32xbf16>, vector<32x8xbf16>, vector<16x8xf32> -> vector<16x8xf32>
    %c0_26 = arith.constant 0 : index
    %c0_27 = arith.constant 0 : index
    %c0_28 = arith.constant 0 : index
    %26 = vector.load %arg11[%c0_26, %c0_27, %c0_28] : memref<1x1x8xf32, #tpu.memory_space<vmem>>, vector<1x1x8xf32>
    %27 = vector.shape_cast %26 : vector<1x1x8xf32> to vector<1x8xf32>
    %28 = vector.broadcast %27 : vector<1x8xf32> to vector<16x8xf32>
    %29 = arith.addf %25, %28 : vector<16x8xf32>
    %30 = arith.truncf %15 : vector<8x8xf32> to vector<8x8xbf16>
    %31 = arith.truncf %22 : vector<16x8xf32> to vector<16x8xbf16>
    %cst_29 = arith.constant dense<0.000000e+00> : vector<8x16xf32>
    %32 = tpu.matmul %30, %31, %cst_29 {dimension_numbers = #tpu.dot_dimension_numbers<[1], [1], [0], [0], [0, 0, 1, 0], [], []>} : vector<8x8xbf16>, vector<16x8xbf16>, vector<8x16xf32> -> vector<8x16xf32>
    %cst_30 = arith.constant dense<0xFF800000> : vector<8xf32>
    %33 = vector.multi_reduction <maximumf>, %32, %cst_30 [1] : vector<8x16xf32> to vector<8xf32>
    %34 = vector.shape_cast %33 : vector<8xf32> to vector<8x1xf32>
    %35 = vector.broadcast %34 : vector<8x1xf32> to vector<8x16xf32>
    %36 = arith.subf %32, %35 : vector<8x16xf32>
    %37 = math.exp %36 : vector<8x16xf32>
    %cst_31 = arith.constant dense<0.000000e+00> : vector<8xf32>
    %38 = vector.multi_reduction <add>, %37, %cst_31 [1] : vector<8x16xf32> to vector<8xf32>
    %39 = vector.shape_cast %38 : vector<8xf32> to vector<8x1xf32>
    %40 = tpu.reciprocal %39 {approx = true} : vector<8x1xf32> -> vector<8x1xf32>
    %41 = vector.broadcast %40 : vector<8x1xf32> to vector<8x16xf32>
    %42 = arith.mulf %37, %41 : vector<8x16xf32>
    %43 = arith.truncf %42 : vector<8x16xf32> to vector<8x16xbf16>
    %44 = arith.truncf %29 : vector<16x8xf32> to vector<16x8xbf16>
    %cst_32 = arith.constant dense<0.000000e+00> : vector<8x8xf32>
    %45 = tpu.matmul %43, %44, %cst_32 {dimension_numbers = #tpu.dot_dimension_numbers<[1], [0], [0], [1], [0, 0, 1, 1], [], []>} : vector<8x16xbf16>, vector<16x8xbf16>, vector<8x8xf32> -> vector<8x8xf32>
    %c0_33 = arith.constant 0 : index
    %c0_34 = arith.constant 0 : index
    %46 = vector.load %arg15[%c0_33, %c0_34] : memref<8x32xf32, #tpu.memory_space<vmem>>, vector<8x32xf32>
    %47 = arith.truncf %45 : vector<8x8xf32> to vector<8x8xbf16>
    %c0_35 = arith.constant 0 : index
    %c0_36 = arith.constant 0 : index
    %c0_37 = arith.constant 0 : index
    %48 = vector.load %arg12[%c0_35, %c0_36, %c0_37] : memref<1x8x32xbf16, #tpu.memory_space<vmem>>, vector<1x8x32xbf16>
    %49 = vector.shape_cast %48 : vector<1x8x32xbf16> to vector<8x32xbf16>
    %cst_38 = arith.constant dense<0.000000e+00> : vector<8x32xf32>
    %50 = tpu.matmul %47, %49, %cst_38 {dimension_numbers = #tpu.dot_dimension_numbers<[1], [0], [0], [1], [0, 0, 1, 1], [], []>} : vector<8x8xbf16>, vector<8x32xbf16>, vector<8x32xf32> -> vector<8x32xf32>
    %51 = arith.addf %46, %50 : vector<8x32xf32>
    %c0_39 = arith.constant 0 : index
    %c0_40 = arith.constant 0 : index
    %52 = vector.load %arg15[%c0_39, %c0_40] : memref<8x32xf32, #tpu.memory_space<vmem>>, vector<8x32xf32>
    tpu.vector_store %arg15[%c0_39, %c0_40], %51 {strides = array<i32>} : memref<8x32xf32, #tpu.memory_space<vmem>>, vector<8x32xf32>,
    %c3_i32 = arith.constant 3 : i32
    %53 = arith.cmpi eq, %arg2, %c3_i32 : i32
    %54 = arith.extui %53 : i1 to i32
    %c0_i32_41 = arith.constant 0 : i32
    %55 = arith.cmpi ne, %54, %c0_i32_41 : i32
    scf.if %55 {
      %c0_42 = arith.constant 0 : index
      %c0_43 = arith.constant 0 : index
      %56 = vector.load %arg15[%c0_42, %c0_43] : memref<8x32xf32, #tpu.memory_space<vmem>>, vector<8x32xf32>
      %c0_44 = arith.constant 0 : index
      %c0_45 = arith.constant 0 : index
      %57 = vector.load %arg13[%c0_44, %c0_45] : memref<1x32xf32, #tpu.memory_space<vmem>>, vector<1x32xf32>
      %58 = vector.broadcast %57 : vector<1x32xf32> to vector<8x32xf32>
      %59 = arith.addf %56, %58 : vector<8x32xf32>
      %c0_46 = arith.constant 0 : index
      %c0_47 = arith.constant 0 : index
      %c0_48 = arith.constant 0 : index
      %60 = vector.load %arg14[%c0_46, %c0_47, %c0_48] : memref<1x8x32xf32, #tpu.memory_space<vmem>>, vector<1x8x32xf32>
      %61 = vector.shape_cast %60 : vector<1x8x32xf32> to vector<8x32xf32>
      %62 = vector.shape_cast %59 : vector<8x32xf32> to vector<1x8x32xf32>
      tpu.vector_store %arg14[%c0_46, %c0_47, %c0_48], %62 {strides = array<i32>} : memref<1x8x32xf32, #tpu.memory_space<vmem>>, vector<1x8x32xf32>,
    } else {
    }
    return
  }
  func.func @transform_0(%arg0: i32, %arg1: i32, %arg2: i32) -> (i32, i32, i32) {
    %c0_i32 = arith.constant 0 : i32
    %c0_i32_0 = arith.constant 0 : i32
    return %arg0, %arg1, %c0_i32 : i32, i32, i32
  }
  func.func @transform_1(%arg0: i32, %arg1: i32, %arg2: i32) -> (i32, i32, i32) {
    %c0_i32 = arith.constant 0 : i32
    %c0_i32_0 = arith.constant 0 : i32
    %c0_i32_1 = arith.constant 0 : i32
    return %arg0, %c0_i32, %c0_i32_0 : i32, i32, i32
  }
  func.func @transform_2(%arg0: i32, %arg1: i32, %arg2: i32) -> (i32, i32, i32) {
    %c0_i32 = arith.constant 0 : i32
    %c0_i32_0 = arith.constant 0 : i32
    %c0_i32_1 = arith.constant 0 : i32
    return %arg0, %c0_i32, %c0_i32_0 : i32, i32, i32
  }
  func.func @transform_3(%arg0: i32, %arg1: i32, %arg2: i32) -> (i32, i32, i32) {
    %c0_i32 = arith.constant 0 : i32
    %c0_i32_0 = arith.constant 0 : i32
    %c0_i32_1 = arith.constant 0 : i32
    return %arg2, %c0_i32, %c0_i32_0 : i32, i32, i32
  }
  func.func @transform_4(%arg0: i32, %arg1: i32, %arg2: i32) -> (i32, i32, i32) {
    %c0_i32 = arith.constant 0 : i32
    %c0_i32_0 = arith.constant 0 : i32
    %c0_i32_1 = arith.constant 0 : i32
    return %arg2, %c0_i32, %c0_i32_0 : i32, i32, i32
  }
  func.func @transform_5(%arg0: i32, %arg1: i32, %arg2: i32) -> (i32, i32, i32) {
    %c0_i32 = arith.constant 0 : i32
    %c0_i32_0 = arith.constant 0 : i32
    %c0_i32_1 = arith.constant 0 : i32
    return %arg2, %c0_i32, %c0_i32_0 : i32, i32, i32
  }
  func.func @transform_6(%arg0: i32, %arg1: i32, %arg2: i32) -> (i32, i32, i32) {
    %c0_i32 = arith.constant 0 : i32
    %c0_i32_0 = arith.constant 0 : i32
    %c0_i32_1 = arith.constant 0 : i32
    return %arg2, %c0_i32, %c0_i32_0 : i32, i32, i32
  }
  func.func @transform_7(%arg0: i32, %arg1: i32, %arg2: i32) -> (i32, i32, i32) {
    %c0_i32 = arith.constant 0 : i32
    %c0_i32_0 = arith.constant 0 : i32
    %c0_i32_1 = arith.constant 0 : i32
    return %arg2, %c0_i32, %c0_i32_0 : i32, i32, i32
  }
  func.func @transform_8(%arg0: i32, %arg1: i32, %arg2: i32) -> (i32, i32, i32) {
    %c0_i32 = arith.constant 0 : i32
    %c0_i32_0 = arith.constant 0 : i32
    %c0_i32_1 = arith.constant 0 : i32
    return %arg2, %c0_i32, %c0_i32_0 : i32, i32, i32
  }
  func.func @transform_9(%arg0: i32, %arg1: i32, %arg2: i32) -> (i32, i32, i32) {
    %c0_i32 = arith.constant 0 : i32
    %c0_i32_0 = arith.constant 0 : i32
    %c0_i32_1 = arith.constant 0 : i32
    return %arg2, %c0_i32, %c0_i32_0 : i32, i32, i32
  }
  func.func @transform_10(%arg0: i32, %arg1: i32, %arg2: i32) -> (i32, i32) {
    %c0_i32 = arith.constant 0 : i32
    %c0_i32_0 = arith.constant 0 : i32
    %c0_i32_1 = arith.constant 0 : i32
    return %c0_i32, %c0_i32_0 : i32, i32
  }
  func.func @transform_11(%arg0: i32, %arg1: i32, %arg2: i32) -> (i32, i32, i32) {
    %c0_i32 = arith.constant 0 : i32
    %c0_i32_0 = arith.constant 0 : i32
    return %arg0, %arg1, %c0_i32 : i32, i32, i32
  }
}

</mosaic_0001>

<llo_original>
// kernel: multi_headed_attention.1
$region0: #{multi_headed_attention.1}
  #allocation0 [shape = 'u32[]', space=smem, size = 0x4, offset = 0x4, fixed_abs, tag = 'smem constant byte address 0x4 - core index']
  #allocation1 [shape = 'u32[144,128]{1,0:T(1,128)}', space=vmem, size = 0x12000, scoped, tag = 'internal scratch']
  #allocation2 [shape = 'f32[8,32]{1,0:T(8,128)}', space=vmem, size = 0x1000, scoped, tag = 'scratch operand']
  %s0 = inlined_call_operand.vmem [shape: bf16[2,8,32], index: 0, kind: input, shape index: {}]
  %s1 = inlined_call_operand.vmem [shape: bf16[2,16,32], index: 1, kind: input, shape index: {}]
  %s2 = inlined_call_operand.vmem [shape: bf16[2,16,32], index: 2, kind: input, shape index: {}]
  %s3 = inlined_call_operand.vmem [shape: bf16[4,32,8], index: 3, kind: input, shape index: {}]
  %s4 = inlined_call_operand.vmem [shape: f32[4,1,8], index: 4, kind: input, shape index: {}]
  %s5 = inlined_call_operand.vmem [shape: bf16[4,32,8], index: 5, kind: input, shape index: {}]
  %s6 = inlined_call_operand.vmem [shape: f32[4,1,8], index: 6, kind: input, shape index: {}]
  %s7 = inlined_call_operand.vmem [shape: bf16[4,32,8], index: 7, kind: input, shape index: {}]
  %s8 = inlined_call_operand.vmem [shape: f32[4,1,8], index: 8, kind: input, shape index: {}]
  %s9 = inlined_call_operand.vmem [shape: bf16[4,8,32], index: 9, kind: input, shape index: {}]
  %s10 = inlined_call_operand.vmem [shape: f32[1,32], index: 10, kind: input, shape index: {}]
  %s11 = inlined_call_operand.hbm [shape: f32[2,8,32], index: 11, kind: output, shape index: {}]
  %s12 = sld [smem:[#allocation0]]
  $region85: #{multi_headed_attention.1} parent=0
    _
  %s14 = ssub.s32 1, %s12
  %s15 = scalar_select 0, %s14, %s12
  $region1: #{multi_headed_attention.1} parent=0
    #allocation3 [shape = 'u8[8192]{0}', space=vmem, size = 0x2000, scoped, tag = 'output window, operand 0']
    #allocation4 [shape = 's32[2]{0}', space=sflag, size = 0x8, scoped, tag = 'scoped memory for multi_headed_attention.1']
    %16 = vsyncpa [#allocation4], 0
    %s17 = scalar_lea.sflag [#allocation4], 1
    %18 = vsyncpa %s17, 0
    loop: start=0, step=1, limit=10
    $region2: #{multi_headed_attention.1} parent=1 // loop_pre_header
      _
    $region3: #{multi_headed_attention.1} parent=1 // loop_header
      %s20 = sphi 0, %s24
      %p21 = scmp.ge.s32.totalorder %s20, 10
      %s27 = sphi 0, %s46
      %s28 = sphi 0, %s42
      %s29 = sphi 0, %s38
      %s30 = sphi 0, %s27
      %s31 = sphi 0, %s28
      %s32 = sphi 0, %s29
      %s33 = sphi 0, %s30
      %s34 = sphi 0, %s31
      %s35 = sphi 0, %s32
      %s51 = sphi 0, %s53
      %s54 = sphi 0, %s51
      %s55 = sphi 0, %s54
      %s71 = sphi 0, %s55
      %s77 = sphi 0, %s79
      %s80 = sphi 0, %s77
      %s81 = sphi 0, %s80
      %s97 = sphi 0, %s81
      %s103 = sphi 0, %s105
      %s106 = sphi 0, %s103
      %s107 = sphi 0, %s106
      %s123 = sphi 0, %s107
      %s129 = sphi 0, %s131
      %s132 = sphi 0, %s129
      %s133 = sphi 0, %s132
      %s149 = sphi 0, %s133
      %s155 = sphi 0, %s157
      %s158 = sphi 0, %s155
      %s159 = sphi 0, %s158
      %s175 = sphi 0, %s159
      %s181 = sphi 0, %s183
      %s184 = sphi 0, %s181
      %s185 = sphi 0, %s184
      %s201 = sphi 0, %s185
      %s207 = sphi 0, %s209
      %s210 = sphi 0, %s207
      %s211 = sphi 0, %s210
      %s227 = sphi 0, %s211
      %s233 = sphi 0, %s235
      %s236 = sphi 0, %s233
      %s237 = sphi 0, %s236
      %s253 = sphi 0, %s237
      %s259 = sphi 0, %s261
      %s262 = sphi 0, %s259
      %s263 = sphi 0, %s262
      %s279 = sphi 0, %s263
      %s285 = sphi 0, %s287
      %s288 = sphi 0, %s285
      %s289 = sphi 0, %s288
      %s305 = sphi 0, %s289
      %s309 = sphi 0, %s309
      %s311 = sphi 0, %s309
      %s312 = sphi 0, %s311
      %s326 = sphi 0, %s312
      %s334 = sphi 0, %s336
      %s337 = sphi 0, %s334
      %s338 = sphi 0, %s337
      %s354 = sphi 0, %s338
    $region4: #{multi_headed_attention.1} parent=1 // loop_header_branch
      %23 = sbr.rel (%p21) target = $region8
    $region5: #{multi_headed_attention.1} parent=1 // loop_body
      %s25 = ssub.s32 %s20, 1
      %s26 = ssub.s32 %s20, 2
      %s36 = sadd.s32 1, %s29
      %p37 = scmp.ge.s32.totalorder %s36, 4
      %s38 = scalar_select %p37, 0, %s36
      %s39 = sadd.s32 1, %s28
      %s40 = scalar_select %p37, %s39, %s28
      %p41 = scmp.ge.s32.totalorder %s40, 1
      %s42 = scalar_select %p41, 0, %s40
      %s43 = sadd.s32 1, %s27
      %s44 = scalar_select %p41, %s43, %s27
      %p45 = scmp.ge.s32.totalorder %s44, 2
      %s46 = scalar_select %p45, 0, %s44
      %s47 = ssub.s32 %s27, %s46
      %s48 = ssub.s32 %s28, %s42
      %s49 = sor.u32 %s47, %s48
      %p50 = scmp.eq.s32.totalorder %s49, 0
      %s52 = sadd.s32 %s51, 1
      %s53 = scalar_select %p50, %s51, %s52
      %p56 = pneg %p50
      %p57 = scmp.eq.s32.totalorder %s20, 7
      %p58 = por %p56, %p57
      %p59 = scmp.ne.s32.totalorder %s51, %s54
      %p60 = scmp.eq.s32.totalorder %s20, 0
      %p61 = por %p59, %p60
      %p62 = scmp.ne.s32.totalorder %s51, %s54
      %p63 = scmp.eq.s32.totalorder %s25, 7
      %p64 = por %p62, %p63
      %p65 = scmp.ne.s32.totalorder %s54, %s55
      %p66 = scmp.eq.s32.totalorder %s25, 0
      %p67 = por %p65, %p66
      %p68 = scmp.ne.s32.totalorder %s54, %s55
      %p69 = scmp.eq.s32.totalorder %s26, 7
      %p70 = por %p68, %p69
      %p72 = scmp.ne.s32.totalorder %s55, %s71
      %p73 = scmp.eq.s32.totalorder %s26, 0
      %p74 = por %p72, %p73
      %s75 = ssub.s32 %s27, %s46
      %p76 = scmp.eq.s32.totalorder %s75, 0
      %s78 = sadd.s32 %s77, 1
      %s79 = scalar_select %p76, %s77, %s78
      %p82 = pneg %p76
      %p83 = scmp.eq.s32.totalorder %s20, 7
      %p84 = por %p82, %p83
      %p85 = scmp.ne.s32.totalorder %s77, %s80
      %p86 = scmp.eq.s32.totalorder %s20, 0
      %p87 = por %p85, %p86
      %p88 = scmp.ne.s32.totalorder %s77, %s80
      %p89 = scmp.eq.s32.totalorder %s25, 7
      %p90 = por %p88, %p89
      %p91 = scmp.ne.s32.totalorder %s80, %s81
      %p92 = scmp.eq.s32.totalorder %s25, 0
      %p93 = por %p91, %p92
      %p94 = scmp.ne.s32.totalorder %s80, %s81
      %p95 = scmp.eq.s32.totalorder %s26, 7
      %p96 = por %p94, %p95
      %p98 = scmp.ne.s32.totalorder %s81, %s97
      %p99 = scmp.eq.s32.totalorder %s26, 0
      %p100 = por %p98, %p99
      %s101 = ssub.s32 %s27, %s46
      %p102 = scmp.eq.s32.totalorder %s101, 0
      %s104 = sadd.s32 %s103, 1
      %s105 = scalar_select %p102, %s103, %s104
      %p108 = pneg %p102
      %p109 = scmp.eq.s32.totalorder %s20, 7
      %p110 = por %p108, %p109
      %p111 = scmp.ne.s32.totalorder %s103, %s106
      %p112 = scmp.eq.s32.totalorder %s20, 0
      %p113 = por %p111, %p112
      %p114 = scmp.ne.s32.totalorder %s103, %s106
      %p115 = scmp.eq.s32.totalorder %s25, 7
      %p116 = por %p114, %p115
      %p117 = scmp.ne.s32.totalorder %s106, %s107
      %p118 = scmp.eq.s32.totalorder %s25, 0
      %p119 = por %p117, %p118
      %p120 = scmp.ne.s32.totalorder %s106, %s107
      %p121 = scmp.eq.s32.totalorder %s26, 7
      %p122 = por %p120, %p121
      %p124 = scmp.ne.s32.totalorder %s107, %s123
      %p125 = scmp.eq.s32.totalorder %s26, 0
      %p126 = por %p124, %p125
      %s127 = ssub.s32 %s29, %s38
      %p128 = scmp.eq.s32.totalorder %s127, 0
      %s130 = sadd.s32 %s129, 1
      %s131 = scalar_select %p128, %s129, %s130
      %p134 = pneg %p128
      %p135 = scmp.eq.s32.totalorder %s20, 7
      %p136 = por %p134, %p135
      %p137 = scmp.ne.s32.totalorder %s129, %s132
      %p138 = scmp.eq.s32.totalorder %s20, 0
      %p139 = por %p137, %p138
      %p140 = scmp.ne.s32.totalorder %s129, %s132
      %p141 = scmp.eq.s32.totalorder %s25, 7
      %p142 = por %p140, %p141
      %p143 = scmp.ne.s32.totalorder %s132, %s133
      %p144 = scmp.eq.s32.totalorder %s25, 0
      %p145 = por %p143, %p144
      %p146 = scmp.ne.s32.totalorder %s132, %s133
      %p147 = scmp.eq.s32.totalorder %s26, 7
      %p148 = por %p146, %p147
      %p150 = scmp.ne.s32.totalorder %s133, %s149
      %p151 = scmp.eq.s32.totalorder %s26, 0
      %p152 = por %p150, %p151
      %s153 = ssub.s32 %s29, %s38
      %p154 = scmp.eq.s32.totalorder %s153, 0
      %s156 = sadd.s32 %s155, 1
      %s157 = scalar_select %p154, %s155, %s156
      %p160 = pneg %p154
      %p161 = scmp.eq.s32.totalorder %s20, 7
      %p162 = por %p160, %p161
      %p163 = scmp.ne.s32.totalorder %s155, %s158
      %p164 = scmp.eq.s32.totalorder %s20, 0
      %p165 = por %p163, %p164
      %p166 = scmp.ne.s32.totalorder %s155, %s158
      %p167 = scmp.eq.s32.totalorder %s25, 7
      %p168 = por %p166, %p167
      %p169 = scmp.ne.s32.totalorder %s158, %s159
      %p170 = scmp.eq.s32.totalorder %s25, 0
      %p171 = por %p169, %p170
      %p172 = scmp.ne.s32.totalorder %s158, %s159
      %p173 = scmp.eq.s32.totalorder %s26, 7
      %p174 = por %p172, %p173
      %p176 = scmp.ne.s32.totalorder %s159, %s175
      %p177 = scmp.eq.s32.totalorder %s26, 0
      %p178 = por %p176, %p177
      %s179 = ssub.s32 %s29, %s38
      %p180 = scmp.eq.s32.totalorder %s179, 0
      %s182 = sadd.s32 %s181, 1
      %s183 = scalar_select %p180, %s181, %s182
      %p186 = pneg %p180
      %p187 = scmp.eq.s32.totalorder %s20, 7
      %p188 = por %p186, %p187
      %p189 = scmp.ne.s32.totalorder %s181, %s184
      %p190 = scmp.eq.s32.totalorder %s20, 0
      %p191 = por %p189, %p190
      %p192 = scmp.ne.s32.totalorder %s181, %s184
      %p193 = scmp.eq.s32.totalorder %s25, 7
      %p194 = por %p192, %p193
      %p195 = scmp.ne.s32.totalorder %s184, %s185
      %p196 = scmp.eq.s32.totalorder %s25, 0
      %p197 = por %p195, %p196
      %p198 = scmp.ne.s32.totalorder %s184, %s185
      %p199 = scmp.eq.s32.totalorder %s26, 7
      %p200 = por %p198, %p199
      %p202 = scmp.ne.s32.totalorder %s185, %s201
      %p203 = scmp.eq.s32.totalorder %s26, 0
      %p204 = por %p202, %p203
      %s205 = ssub.s32 %s29, %s38
      %p206 = scmp.eq.s32.totalorder %s205, 0
      %s208 = sadd.s32 %s207, 1
      %s209 = scalar_select %p206, %s207, %s208
      %p212 = pneg %p206
      %p213 = scmp.eq.s32.totalorder %s20, 7
      %p214 = por %p212, %p213
      %p215 = scmp.ne.s32.totalorder %s207, %s210
      %p216 = scmp.eq.s32.totalorder %s20, 0
      %p217 = por %p215, %p216
      %p218 = scmp.ne.s32.totalorder %s207, %s210
      %p219 = scmp.eq.s32.totalorder %s25, 7
      %p220 = por %p218, %p219
      %p221 = scmp.ne.s32.totalorder %s210, %s211
      %p222 = scmp.eq.s32.totalorder %s25, 0
      %p223 = por %p221, %p222
      %p224 = scmp.ne.s32.totalorder %s210, %s211
      %p225 = scmp.eq.s32.totalorder %s26, 7
      %p226 = por %p224, %p225
      %p228 = scmp.ne.s32.totalorder %s211, %s227
      %p229 = scmp.eq.s32.totalorder %s26, 0
      %p230 = por %p228, %p229
      %s231 = ssub.s32 %s29, %s38
      %p232 = scmp.eq.s32.totalorder %s231, 0
      %s234 = sadd.s32 %s233, 1
      %s235 = scalar_select %p232, %s233, %s234
      %p238 = pneg %p232
      %p239 = scmp.eq.s32.totalorder %s20, 7
      %p240 = por %p238, %p239
      %p241 = scmp.ne.s32.totalorder %s233, %s236
      %p242 = scmp.eq.s32.totalorder %s20, 0
      %p243 = por %p241, %p242
      %p244 = scmp.ne.s32.totalorder %s233, %s236
      %p245 = scmp.eq.s32.totalorder %s25, 7
      %p246 = por %p244, %p245
      %p247 = scmp.ne.s32.totalorder %s236, %s237
      %p248 = scmp.eq.s32.totalorder %s25, 0
      %p249 = por %p247, %p248
      %p250 = scmp.ne.s32.totalorder %s236, %s237
      %p251 = scmp.eq.s32.totalorder %s26, 7
      %p252 = por %p250, %p251
      %p254 = scmp.ne.s32.totalorder %s237, %s253
      %p255 = scmp.eq.s32.totalorder %s26, 0
      %p256 = por %p254, %p255
      %s257 = ssub.s32 %s29, %s38
      %p258 = scmp.eq.s32.totalorder %s257, 0
      %s260 = sadd.s32 %s259, 1
      %s261 = scalar_select %p258, %s259, %s260
      %p264 = pneg %p258
      %p265 = scmp.eq.s32.totalorder %s20, 7
      %p266 = por %p264, %p265
      %p267 = scmp.ne.s32.totalorder %s259, %s262
      %p268 = scmp.eq.s32.totalorder %s20, 0
      %p269 = por %p267, %p268
      %p270 = scmp.ne.s32.totalorder %s259, %s262
      %p271 = scmp.eq.s32.totalorder %s25, 7
      %p272 = por %p270, %p271
      %p273 = scmp.ne.s32.totalorder %s262, %s263
      %p274 = scmp.eq.s32.totalorder %s25, 0
      %p275 = por %p273, %p274
      %p276 = scmp.ne.s32.totalorder %s262, %s263
      %p277 = scmp.eq.s32.totalorder %s26, 7
      %p278 = por %p276, %p277
      %p280 = scmp.ne.s32.totalorder %s263, %s279
      %p281 = scmp.eq.s32.totalorder %s26, 0
      %p282 = por %p280, %p281
      %s283 = ssub.s32 %s29, %s38
      %p284 = scmp.eq.s32.totalorder %s283, 0
      %s286 = sadd.s32 %s285, 1
      %s287 = scalar_select %p284, %s285, %s286
      %p290 = pneg %p284
      %p291 = scmp.eq.s32.totalorder %s20, 7
      %p292 = por %p290, %p291
      %p293 = scmp.ne.s32.totalorder %s285, %s288
      %p294 = scmp.eq.s32.totalorder %s20, 0
      %p295 = por %p293, %p294
      %p296 = scmp.ne.s32.totalorder %s285, %s288
      %p297 = scmp.eq.s32.totalorder %s25, 7
      %p298 = por %p296, %p297
      %p299 = scmp.ne.s32.totalorder %s288, %s289
      %p300 = scmp.eq.s32.totalorder %s25, 0
      %p301 = por %p299, %p300
      %p302 = scmp.ne.s32.totalorder %s288, %s289
      %p303 = scmp.eq.s32.totalorder %s26, 7
      %p304 = por %p302, %p303
      %p306 = scmp.ne.s32.totalorder %s289, %s305
      %p307 = scmp.eq.s32.totalorder %s26, 0
      %p308 = por %p306, %p307
      %s310 = sadd.s32 %s309, 1
      %p313 = scmp.eq.s32.totalorder %s20, 7
      %p314 = scmp.ne.s32.totalorder %s309, %s311
      %p315 = scmp.eq.s32.totalorder %s20, 0
      %p316 = por %p314, %p315
      %p317 = scmp.ne.s32.totalorder %s309, %s311
      %p318 = scmp.eq.s32.totalorder %s25, 7
      %p319 = por %p317, %p318
      %p320 = scmp.ne.s32.totalorder %s311, %s312
      %p321 = scmp.eq.s32.totalorder %s25, 0
      %p322 = por %p320, %p321
      %p323 = scmp.ne.s32.totalorder %s311, %s312
      %p324 = scmp.eq.s32.totalorder %s26, 7
      %p325 = por %p323, %p324
      %p327 = scmp.ne.s32.totalorder %s312, %s326
      %p328 = scmp.eq.s32.totalorder %s26, 0
      %p329 = por %p327, %p328
      %s330 = ssub.s32 %s27, %s46
      %s331 = ssub.s32 %s28, %s42
      %s332 = sor.u32 %s330, %s331
      %p333 = scmp.eq.s32.totalorder %s332, 0
      %s335 = sadd.s32 %s334, 1
      %s336 = scalar_select %p333, %s334, %s335
      %p339 = pneg %p333
      %p340 = scmp.eq.s32.totalorder %s20, 7
      %p341 = por %p339, %p340
      %p342 = scmp.ne.s32.totalorder %s334, %s337
      %p343 = scmp.eq.s32.totalorder %s20, 0
      %p344 = por %p342, %p343
      %p345 = scmp.ne.s32.totalorder %s334, %s337
      %p346 = scmp.eq.s32.totalorder %s25, 7
      %p347 = por %p345, %p346
      %p348 = scmp.ne.s32.totalorder %s337, %s338
      %p349 = scmp.eq.s32.totalorder %s25, 0
      %p350 = por %p348, %p349
      %p351 = scmp.ne.s32.totalorder %s337, %s338
      %p352 = scmp.eq.s32.totalorder %s26, 7
      %p353 = por %p351, %p352
      %p355 = scmp.ne.s32.totalorder %s338, %s354
      %p356 = scmp.eq.s32.totalorder %s26, 0
      %p357 = por %p355, %p356
      %p358 = scmp.le.s32.totalorder 1, %s20
      %p359 = scmp.lt.s32.totalorder %s20, 9
      %p360 = pnand %p358, %p359
      %p361 = pneg %p360
      // Predicated region
      $region9: #{multi_headed_attention.1} parent=5 // pred_check
        _
      $region10: #{multi_headed_attention.1} parent=5 // pred_check_branch
        %363 = sbr.rel (%p360) target = $region12
      $region11: #{multi_headed_attention.1} parent=5 // pred_region
        %s364 = ssub.s32 %s20, 1
        // Predicated region
        $region13: #{multi_headed_attention.1} parent=11 // pred_check
          %p365 = pneg %p322
        $region14: #{multi_headed_attention.1} parent=11 // pred_check_branch
          %367 = sbr.rel (%p365) target = $region16
        $region15: #{multi_headed_attention.1} parent=11 // pred_region
          _
        $region16: #{multi_headed_attention.1} parent=11 // pred_fallthru
          _
      $region12: #{multi_headed_attention.1} parent=5 // pred_fallthru
        _
      %p368 = scmp.lt.s32.totalorder %s20, 8
      // Predicated region
      $region17: #{multi_headed_attention.1} parent=5 // pred_check
        %p369 = pneg %p368
      $region18: #{multi_headed_attention.1} parent=5 // pred_check_branch
        %371 = sbr.rel (%p369) target = $region20
      $region19: #{multi_headed_attention.1} parent=5 // pred_region
        // Predicated region
        $region21: #{multi_headed_attention.1} parent=19 // pred_check
          %p372 = pneg %p61
        $region22: #{multi_headed_attention.1} parent=19 // pred_check_branch
          %374 = sbr.rel (%p372) target = $region24
        $region23: #{multi_headed_attention.1} parent=19 // pred_region
          %p375 = scmp.lt.s32.totalorder %s27, 1
          %s376 = scalar_select %p375, %s27, 1
          %p377 = scmp.lt.s32.totalorder %s28, 0
          %s378 = scalar_select %p377, %s28, 0
          %s379 = sadd.s32 %s378, %s376
          %s380 = smul.addr %s379, 4
          %s381 = scalar_lea.vmem %s0, %s380
        $region24: #{multi_headed_attention.1} parent=19 // pred_fallthru
          _
        // Predicated region
        $region25: #{multi_headed_attention.1} parent=19 // pred_check
          %p382 = pneg %p87
        $region26: #{multi_headed_attention.1} parent=19 // pred_check_branch
          %384 = sbr.rel (%p382) target = $region28
        $region27: #{multi_headed_attention.1} parent=19 // pred_region
          %p385 = scmp.lt.s32.totalorder %s27, 1
          %s386 = scalar_select %p385, %s27, 1
          %s387 = smul.addr %s386, 2
          %s388 = smul.addr %s387, 4
          %s389 = scalar_lea.vmem %s1, %s388
        $region28: #{multi_headed_attention.1} parent=19 // pred_fallthru
          _
        // Predicated region
        $region29: #{multi_headed_attention.1} parent=19 // pred_check
          %p390 = pneg %p113
        $region30: #{multi_headed_attention.1} parent=19 // pred_check_branch
          %392 = sbr.rel (%p390) target = $region32
        $region31: #{multi_headed_attention.1} parent=19 // pred_region
          %p393 = scmp.lt.s32.totalorder %s27, 1
          %s394 = scalar_select %p393, %s27, 1
          %s395 = smul.addr %s394, 2
          %s396 = smul.addr %s395, 4
          %s397 = scalar_lea.vmem %s2, %s396
        $region32: #{multi_headed_attention.1} parent=19 // pred_fallthru
          _
        // Predicated region
        $region33: #{multi_headed_attention.1} parent=19 // pred_check
          %p398 = pneg %p139
        $region34: #{multi_headed_attention.1} parent=19 // pred_check_branch
          %400 = sbr.rel (%p398) target = $region36
        $region35: #{multi_headed_attention.1} parent=19 // pred_region
          %p401 = scmp.lt.s32.totalorder %s29, 3
          %s402 = scalar_select %p401, %s29, 3
          %s403 = smul.addr %s402, 4
          %s404 = smul.addr %s403, 4
          %s405 = scalar_lea.vmem %s3, %s404
        $region36: #{multi_headed_attention.1} parent=19 // pred_fallthru
          _
        // Predicated region
        $region37: #{multi_headed_attention.1} parent=19 // pred_check
          %p406 = pneg %p165
        $region38: #{multi_headed_attention.1} parent=19 // pred_check_branch
          %408 = sbr.rel (%p406) target = $region40
        $region39: #{multi_headed_attention.1} parent=19 // pred_region
          %p409 = scmp.lt.s32.totalorder %s29, 3
          %s410 = scalar_select %p409, %s29, 3
          %s411 = scalar_lea.vmem %s4, %s410
        $region40: #{multi_headed_attention.1} parent=19 // pred_fallthru
          _
        // Predicated region
        $region41: #{multi_headed_attention.1} parent=19 // pred_check
          %p412 = pneg %p191
        $region42: #{multi_headed_attention.1} parent=19 // pred_check_branch
          %414 = sbr.rel (%p412) target = $region44
        $region43: #{multi_headed_attention.1} parent=19 // pred_region
          %p415 = scmp.lt.s32.totalorder %s29, 3
          %s416 = scalar_select %p415, %s29, 3
          %s417 = smul.addr %s416, 4
          %s418 = smul.addr %s417, 4
          %s419 = scalar_lea.vmem %s5, %s418
        $region44: #{multi_headed_attention.1} parent=19 // pred_fallthru
          _
        // Predicated region
        $region45: #{multi_headed_attention.1} parent=19 // pred_check
          %p420 = pneg %p217
        $region46: #{multi_headed_attention.1} parent=19 // pred_check_branch
          %422 = sbr.rel (%p420) target = $region48
        $region47: #{multi_headed_attention.1} parent=19 // pred_region
          %p423 = scmp.lt.s32.totalorder %s29, 3
          %s424 = scalar_select %p423, %s29, 3
          %s425 = scalar_lea.vmem %s6, %s424
        $region48: #{multi_headed_attention.1} parent=19 // pred_fallthru
          _
        // Predicated region
        $region49: #{multi_headed_attention.1} parent=19 // pred_check
          %p426 = pneg %p243
        $region50: #{multi_headed_attention.1} parent=19 // pred_check_branch
          %428 = sbr.rel (%p426) target = $region52
        $region51: #{multi_headed_attention.1} parent=19 // pred_region
          %p429 = scmp.lt.s32.totalorder %s29, 3
          %s430 = scalar_select %p429, %s29, 3
          %s431 = smul.addr %s430, 4
          %s432 = smul.addr %s431, 4
          %s433 = scalar_lea.vmem %s7, %s432
        $region52: #{multi_headed_attention.1} parent=19 // pred_fallthru
          _
        // Predicated region
        $region53: #{multi_headed_attention.1} parent=19 // pred_check
          %p434 = pneg %p269
        $region54: #{multi_headed_attention.1} parent=19 // pred_check_branch
          %436 = sbr.rel (%p434) target = $region56
        $region55: #{multi_headed_attention.1} parent=19 // pred_region
          %p437 = scmp.lt.s32.totalorder %s29, 3
          %s438 = scalar_select %p437, %s29, 3
          %s439 = scalar_lea.vmem %s8, %s438
        $region56: #{multi_headed_attention.1} parent=19 // pred_fallthru
          _
        // Predicated region
        $region57: #{multi_headed_attention.1} parent=19 // pred_check
          %p440 = pneg %p295
        $region58: #{multi_headed_attention.1} parent=19 // pred_check_branch
          %442 = sbr.rel (%p440) target = $region60
        $region59: #{multi_headed_attention.1} parent=19 // pred_region
          %p443 = scmp.lt.s32.totalorder %s29, 3
          %s444 = scalar_select %p443, %s29, 3
          %s445 = smul.addr %s444, 4
          %s446 = scalar_lea.vmem %s9, %s445
        $region60: #{multi_headed_attention.1} parent=19 // pred_fallthru
          _
      $region20: #{multi_headed_attention.1} parent=5 // pred_fallthru
        _
      %p447 = scmp.le.s32.totalorder 1, %s20
      %p448 = scmp.lt.s32.totalorder %s20, 9
      %p449 = pnand %p447, %p448
      %p450 = pneg %p449
      // Predicated region
      $region61: #{multi_headed_attention.1} parent=5 // pred_check
        _
      $region62: #{multi_headed_attention.1} parent=5 // pred_check_branch
        %452 = sbr.rel (%p449) target = $region64
      $region63: #{multi_headed_attention.1} parent=5 // pred_region
        %s453 = ssub.s32 %s20, 1
        %p454 = scmp.lt.s32.totalorder %s30, 1
        %s455 = scalar_select %p454, %s30, 1
        %p456 = scmp.lt.s32.totalorder %s31, 0
        %s457 = scalar_select %p456, %s31, 0
        %s458 = sadd.s32 %s457, %s455
        %s459 = smul.addr %s458, 4
        %s460 = scalar_lea.vmem %s0, %s459
        %p461 = pneg %p67
        %p462 = pneg %p64
        %p463 = scmp.lt.s32.totalorder %s30, 1
        %s464 = scalar_select %p463, %s30, 1
        %s465 = smul.addr %s464, 2
        %s466 = smul.addr %s465, 4
        %s467 = scalar_lea.vmem %s1, %s466
        %p468 = pneg %p93
        %p469 = pneg %p90
        %p470 = scmp.lt.s32.totalorder %s30, 1
        %s471 = scalar_select %p470, %s30, 1
        %s472 = smul.addr %s471, 2
        %s473 = smul.addr %s472, 4
        %s474 = scalar_lea.vmem %s2, %s473
        %p475 = pneg %p119
        %p476 = pneg %p116
        %p477 = scmp.lt.s32.totalorder %s32, 3
        %s478 = scalar_select %p477, %s32, 3
        %s479 = smul.addr %s478, 4
        %s480 = smul.addr %s479, 4
        %s481 = scalar_lea.vmem %s3, %s480
        %p482 = pneg %p145
        %p483 = pneg %p142
        %p484 = scmp.lt.s32.totalorder %s32, 3
        %s485 = scalar_select %p484, %s32, 3
        %s486 = scalar_lea.vmem %s4, %s485
        %p487 = pneg %p171
        %p488 = pneg %p168
        %p489 = scmp.lt.s32.totalorder %s32, 3
        %s490 = scalar_select %p489, %s32, 3
        %s491 = smul.addr %s490, 4
        %s492 = smul.addr %s491, 4
        %s493 = scalar_lea.vmem %s5, %s492
        %p494 = pneg %p197
        %p495 = pneg %p194
        %p496 = scmp.lt.s32.totalorder %s32, 3
        %s497 = scalar_select %p496, %s32, 3
        %s498 = scalar_lea.vmem %s6, %s497
        %p499 = pneg %p223
        %p500 = pneg %p220
        %p501 = scmp.lt.s32.totalorder %s32, 3
        %s502 = scalar_select %p501, %s32, 3
        %s503 = smul.addr %s502, 4
        %s504 = smul.addr %s503, 4
        %s505 = scalar_lea.vmem %s7, %s504
        %p506 = pneg %p249
        %p507 = pneg %p246
        %p508 = scmp.lt.s32.totalorder %s32, 3
        %s509 = scalar_select %p508, %s32, 3
        %s510 = scalar_lea.vmem %s8, %s509
        %p511 = pneg %p275
        %p512 = pneg %p272
        %p513 = scmp.lt.s32.totalorder %s32, 3
        %s514 = scalar_select %p513, %s32, 3
        %s515 = smul.addr %s514, 4
        %s516 = scalar_lea.vmem %s9, %s515
        %p517 = pneg %p301
        %p518 = pneg %p298
        %p519 = pneg %p322
        %p520 = pneg %p319
        %p521 = pneg %p350
        %p522 = pneg %p347
        %s523 = sand.u32 %s337, 1
        %s524 = scalar_lea.sflag [#allocation4], %s523
        %s525 = sand.u32 %s337, 1
        %s526 = smul.addr %s525, 8
        %s527 = scalar_lea.vmem [#allocation3], %s526
        %p528 = scmp.lt.s32.totalorder %s30, 1
        %s529 = scalar_select %p528, %s30, 1
        %p530 = scmp.lt.s32.totalorder %s31, 0
        %s531 = scalar_select %p530, %s31, 0
        %s532 = sadd.s32 %s531, %s529
        %s533 = smul.addr %s532, 4
        %s534 = scalar_lea.vmem %s0, %s533
        %p535 = scmp.lt.s32.totalorder %s30, 1
        %s536 = scalar_select %p535, %s30, 1
        %s537 = smul.addr %s536, 2
        %s538 = smul.addr %s537, 4
        %s539 = scalar_lea.vmem %s1, %s538
        %p540 = scmp.lt.s32.totalorder %s30, 1
        %s541 = scalar_select %p540, %s30, 1
        %s542 = smul.addr %s541, 2
        %s543 = smul.addr %s542, 4
        %s544 = scalar_lea.vmem %s2, %s543
        %p545 = scmp.lt.s32.totalorder %s32, 3
        %s546 = scalar_select %p545, %s32, 3
        %s547 = smul.addr %s546, 4
        %s548 = smul.addr %s547, 4
        %s549 = scalar_lea.vmem %s3, %s548
        %p550 = scmp.lt.s32.totalorder %s32, 3
        %s551 = scalar_select %p550, %s32, 3
        %s552 = scalar_lea.vmem %s4, %s551
        %p553 = scmp.lt.s32.totalorder %s32, 3
        %s554 = scalar_select %p553, %s32, 3
        %s555 = smul.addr %s554, 4
        %s556 = smul.addr %s555, 4
        %s557 = scalar_lea.vmem %s5, %s556
        %p558 = scmp.lt.s32.totalorder %s32, 3
        %s559 = scalar_select %p558, %s32, 3
        %s560 = scalar_lea.vmem %s6, %s559
        %p561 = scmp.lt.s32.totalorder %s32, 3
        %s562 = scalar_select %p561, %s32, 3
        %s563 = smul.addr %s562, 4
        %s564 = smul.addr %s563, 4
        %s565 = scalar_lea.vmem %s7, %s564
        %p566 = scmp.lt.s32.totalorder %s32, 3
        %s567 = scalar_select %p566, %s32, 3
        %s568 = scalar_lea.vmem %s8, %s567
        %p569 = scmp.lt.s32.totalorder %s32, 3
        %s570 = scalar_select %p569, %s32, 3
        %s571 = smul.addr %s570, 4
        %s572 = scalar_lea.vmem %s9, %s571
        %p574 = scmp.eq.s32.totalorder %s32, 0
        // Predicated region
        $region65: #{multi_headed_attention.1} parent=63 // pred_check
          %p575 = pneg %p574
        $region66: #{multi_headed_attention.1} parent=63 // pred_check_branch
          %577 = sbr.rel (%p575) target = $region68
        $region67: #{multi_headed_attention.1} parent=63 // pred_region
          %vm578 = vcmask 261120
          %579 = vst.msk [vmem:[#allocation2] sm:$0xff] %vm578, 0.0
        $region68: #{multi_headed_attention.1} parent=63 // pred_fallthru
          _
        %v580 = vld [vmem:[%s534] sm:$0xf]
        %v581 = vld [vmem:[%s539] sm:$0xf]
        %v582 = vld [vmem:[%s539 + $0x4] sm:$0xf]
        %v583 = vld [vmem:[%s544] sm:$0xf]
        %v584 = vld [vmem:[%s544 + $0x4] sm:$0xf]
        %v585 = vld [vmem:[%s549] sm:$0xf]
        %v586 = vld [vmem:[%s549 + $0x4] sm:$0xf]
        %v587 = vld [vmem:[%s549 + $0x8] sm:$0xf]
        %v588 = vld [vmem:[%s549 + $0xc] sm:$0xf]
        %v589 = vld [vmem:[%s552] sm:$0x1]
        %v591 = vlaneseq
        %v592 = vshrl.u32 %v591, 7
        %v593 = vsub.s32 0, %v592
        %v594 = vrot.slane %v589, %v593
        %v600 = vunpack.c.l.b16 %v585
        %v601 = vunpack.c.l.b16 %v586
        %v602 = vunpack.c.l.b16 %v587
        %v603 = vunpack.c.l.b16 %v588
        %v604 = vpack.c.b16 %v601, %v600
        %v605 = vpack.c.b16 %v603, %v602
        %vm608 = vcmask 261120
        %v610 = vsel %vm608, %v580, 0
        %612 = vmatprep.subr.bf16.mxu0 0
        %613 = vmatpush1.bf16.msra.mxu0 %v604
        %614 = vmatprep.subr.bf16.mxu0 0
        %615 = vmatpush1.bf16.msra.mxu0 %v605
        %616 = vmatprep.subr.bf16.mxu0 0
        %617 = vmatpush1.bf16.msra.mxu0 0
        %618 = vmatprep.subr.bf16.mxu0 0
        %619 = vmatpush1.bf16.msra.mxu0 0
        %620 = vmatprep.subr.bf16.mxu0 0
        %621 = vmatpush1.bf16.msra.mxu0 0
        %622 = vmatprep.subr.bf16.mxu0 0
        %623 = vmatpush1.bf16.msra.mxu0 0
        %624 = vmatprep.subr.bf16.mxu0 0
        %625 = vmatpush1.bf16.msra.mxu0 0
        %626 = vmatprep.subr.bf16.mxu0 0
        %627 = vmatpush1.bf16.msra.mxu0 0
        %628 = vmatprep.subr.bf16.mxu0 0
        %629 = vmatpush1.bf16.msra.mxu0 0
        %630 = vmatprep.subr.bf16.mxu0 0
        %631 = vmatpush1.bf16.msra.mxu0 0
        %632 = vmatprep.subr.bf16.mxu0 0
        %633 = vmatpush1.bf16.msra.mxu0 0
        %634 = vmatprep.subr.bf16.mxu0 0
        %635 = vmatpush1.bf16.msra.mxu0 0
        %636 = vmatprep.subr.bf16.mxu0 0
        %637 = vmatpush1.bf16.msra.mxu0 0
        %638 = vmatprep.subr.bf16.mxu0 0
        %639 = vmatpush1.bf16.msra.mxu0 0
        %640 = vmatprep.subr.bf16.mxu0 0
        %641 = vmatpush1.bf16.msra.mxu0 0
        %642 = vmatprep.subr.bf16.mxu0 0
        %643 = vmatpush1.bf16.msra.mxu0 0
        %644 = vmatprep.mubr.bf16.mxu0 0
        %645 = vmatmul.mubr.bf16.gmra.mrb[0].mxu0 %v610
        %v646 = vpop.f32.mrb[0].mxu0
        %v647 = vadd.f32 %v594, %v646
        %v648 = vpop.f32.mrb[0].mxu0
        %v649 = vpop.f32.mrb[0].mxu0
        %v650 = vpop.f32.mrb[0].mxu0
        %651 = vdwg.mxu0
        %v652 = vld [vmem:[%s557] sm:$0xf]
        %v653 = vld [vmem:[%s557 + $0x4] sm:$0xf]
        %v654 = vld [vmem:[%s557 + $0x8] sm:$0xf]
        %v655 = vld [vmem:[%s557 + $0xc] sm:$0xf]
        %v656 = vld [vmem:[%s560] sm:$0x1]
        %v658 = vlaneseq
        %v659 = vshrl.u32 %v658, 7
        %v660 = vsub.s32 0, %v659
        %v661 = vrot.slane %v656, %v660
        %v665 = vunpack.c.l.b16 %v581
        %v666 = vunpack.c.l.b16 %v582
        %v667 = vpack.c.b16 %v666, %v665
        %v672 = vunpack.c.l.b16 %v652
        %v673 = vunpack.c.l.b16 %v653
        %v674 = vunpack.c.l.b16 %v654
        %v675 = vunpack.c.l.b16 %v655
        %v676 = vpack.c.b16 %v673, %v672
        %v677 = vpack.c.b16 %v675, %v674
        %v681 = vsel %vm608, %v667, 0
        %683 = vmatprep.subr.bf16.mxu0 0
        %684 = vmatpush1.bf16.msra.mxu0 %v676
        %685 = vmatprep.subr.bf16.mxu0 0
        %686 = vmatpush1.bf16.msra.mxu0 %v677
        %687 = vmatprep.subr.bf16.mxu0 0
        %688 = vmatpush1.bf16.msra.mxu0 0
        %689 = vmatprep.subr.bf16.mxu0 0
        %690 = vmatpush1.bf16.msra.mxu0 0
        %691 = vmatprep.subr.bf16.mxu0 0
        %692 = vmatpush1.bf16.msra.mxu0 0
        %693 = vmatprep.subr.bf16.mxu0 0
        %694 = vmatpush1.bf16.msra.mxu0 0
        %695 = vmatprep.subr.bf16.mxu0 0
        %696 = vmatpush1.bf16.msra.mxu0 0
        %697 = vmatprep.subr.bf16.mxu0 0
        %698 = vmatpush1.bf16.msra.mxu0 0
        %699 = vmatprep.subr.bf16.mxu0 0
        %700 = vmatpush1.bf16.msra.mxu0 0
        %701 = vmatprep.subr.bf16.mxu0 0
        %702 = vmatpush1.bf16.msra.mxu0 0
        %703 = vmatprep.subr.bf16.mxu0 0
        %704 = vmatpush1.bf16.msra.mxu0 0
        %705 = vmatprep.subr.bf16.mxu0 0
        %706 = vmatpush1.bf16.msra.mxu0 0
        %707 = vmatprep.subr.bf16.mxu0 0
        %708 = vmatpush1.bf16.msra.mxu0 0
        %709 = vmatprep.subr.bf16.mxu0 0
        %710 = vmatpush1.bf16.msra.mxu0 0
        %711 = vmatprep.subr.bf16.mxu0 0
        %712 = vmatpush1.bf16.msra.mxu0 0
        %713 = vmatprep.subr.bf16.mxu0 0
        %714 = vmatpush1.bf16.msra.mxu0 0
        %715 = vmatprep.mubr.bf16.mxu0 0
        %716 = vmatmul.mubr.bf16.gmra.mrb[0].mxu0 %v681
        %v717 = vpop.f32.mrb[0].mxu0
        %v718 = vadd.f32 %v661, %v717
        %v719 = vpop.f32.mrb[0].mxu0
        %v720 = vpop.f32.mrb[0].mxu0
        %v721 = vadd.f32 %v661, %v720
        %v722 = vpop.f32.mrb[0].mxu0
        %723 = vdwg.mxu0
        %v724 = vld [vmem:[%s565] sm:$0xf]
        %v725 = vld [vmem:[%s565 + $0x4] sm:$0xf]
        %v726 = vld [vmem:[%s565 + $0x8] sm:$0xf]
        %v727 = vld [vmem:[%s565 + $0xc] sm:$0xf]
        %v728 = vld [vmem:[%s568] sm:$0x1]
        %v730 = vlaneseq
        %v731 = vshrl.u32 %v730, 7
        %v732 = vsub.s32 0, %v731
        %v733 = vrot.slane %v728, %v732
        %v737 = vunpack.c.l.b16 %v583
        %v738 = vunpack.c.l.b16 %v584
        %v739 = vpack.c.b16 %v738, %v737
        %v744 = vunpack.c.l.b16 %v724
        %v745 = vunpack.c.l.b16 %v725
        %v746 = vunpack.c.l.b16 %v726
        %v747 = vunpack.c.l.b16 %v727
        %v748 = vpack.c.b16 %v745, %v744
        %v749 = vpack.c.b16 %v747, %v746
        %v753 = vsel %vm608, %v739, 0
        %755 = vmatprep.subr.bf16.mxu0 0
        %756 = vmatpush1.bf16.msra.mxu0 %v748
        %757 = vmatprep.subr.bf16.mxu0 0
        %758 = vmatpush1.bf16.msra.mxu0 %v749
        %759 = vmatprep.subr.bf16.mxu0 0
        %760 = vmatpush1.bf16.msra.mxu0 0
        %761 = vmatprep.subr.bf16.mxu0 0
        %762 = vmatpush1.bf16.msra.mxu0 0
        %763 = vmatprep.subr.bf16.mxu0 0
        %764 = vmatpush1.bf16.msra.mxu0 0
        %765 = vmatprep.subr.bf16.mxu0 0
        %766 = vmatpush1.bf16.msra.mxu0 0
        %767 = vmatprep.subr.bf16.mxu0 0
        %768 = vmatpush1.bf16.msra.mxu0 0
        %769 = vmatprep.subr.bf16.mxu0 0
        %770 = vmatpush1.bf16.msra.mxu0 0
        %771 = vmatprep.subr.bf16.mxu0 0
        %772 = vmatpush1.bf16.msra.mxu0 0
        %773 = vmatprep.subr.bf16.mxu0 0
        %774 = vmatpush1.bf16.msra.mxu0 0
        %775 = vmatprep.subr.bf16.mxu0 0
        %776 = vmatpush1.bf16.msra.mxu0 0
        %777 = vmatprep.subr.bf16.mxu0 0
        %778 = vmatpush1.bf16.msra.mxu0 0
        %779 = vmatprep.subr.bf16.mxu0 0
        %780 = vmatpush1.bf16.msra.mxu0 0
        %781 = vmatprep.subr.bf16.mxu0 0
        %782 = vmatpush1.bf16.msra.mxu0 0
        %783 = vmatprep.subr.bf16.mxu0 0
        %784 = vmatpush1.bf16.msra.mxu0 0
        %785 = vmatprep.subr.bf16.mxu0 0
        %786 = vmatpush1.bf16.msra.mxu0 0
        %787 = vmatprep.mubr.bf16.mxu0 0
        %788 = vmatmul.mubr.bf16.gmra.mrb[0].mxu0 %v753
        %v789 = vpop.f32.mrb[0].mxu0
        %v790 = vadd.f32 %v733, %v789
        %v791 = vpop.f32.mrb[0].mxu0
        %v792 = vpop.f32.mrb[0].mxu0
        %v793 = vadd.f32 %v733, %v792
        %v794 = vpop.f32.mrb[0].mxu0
        %795 = vdwg.mxu0
        %v796 = vpack.c.bf16 %v647, %v647
        %v797 = vpack.c.bf16 %v721, %v718
        %vm798 = vcmask 64512
        %v800 = vsel %vm798, %v796, 0
        %v803 = vsel %vm798, %v797, 0
        %805 = vmatprep.subr.bf16.mxu0 0
        %806 = vmatpush1.bf16.xpose.msra.mxu0 %v803
        %807 = vmatprep.subr.bf16.mxu0 0
        %808 = vmatpush1.bf16.xpose.msra.mxu0 0
        %809 = vmatprep.subr.bf16.mxu0 0
        %810 = vmatpush1.bf16.xpose.msra.mxu0 0
        %811 = vmatprep.subr.bf16.mxu0 0
        %812 = vmatpush1.bf16.xpose.msra.mxu0 0
        %813 = vmatprep.subr.bf16.mxu0 0
        %814 = vmatpush1.bf16.xpose.msra.mxu0 0
        %815 = vmatprep.subr.bf16.mxu0 0
        %816 = vmatpush1.bf16.xpose.msra.mxu0 0
        %817 = vmatprep.subr.bf16.mxu0 0
        %818 = vmatpush1.bf16.xpose.msra.mxu0 0
        %819 = vmatprep.subr.bf16.mxu0 0
        %820 = vmatpush1.bf16.xpose.msra.mxu0 0
        %821 = vmatprep.subr.bf16.mxu0 0
        %822 = vmatpush1.bf16.xpose.msra.mxu0 0
        %823 = vmatprep.subr.bf16.mxu0 0
        %824 = vmatpush1.bf16.xpose.msra.mxu0 0
        %825 = vmatprep.subr.bf16.mxu0 0
        %826 = vmatpush1.bf16.xpose.msra.mxu0 0
        %827 = vmatprep.subr.bf16.mxu0 0
        %828 = vmatpush1.bf16.xpose.msra.mxu0 0
        %829 = vmatprep.subr.bf16.mxu0 0
        %830 = vmatpush1.bf16.xpose.msra.mxu0 0
        %831 = vmatprep.subr.bf16.mxu0 0
        %832 = vmatpush1.bf16.xpose.msra.mxu0 0
        %833 = vmatprep.subr.bf16.mxu0 0
        %834 = vmatpush1.bf16.xpose.msra.mxu0 0
        %835 = vmatprep.subr.bf16.mxu0 0
        %836 = vmatpush1.bf16.xpose.msra.mxu0 0
        %837 = vmatprep.mubr.bf16.mxu0 0
        %838 = vmatmul.mubr.bf16.gmra.mrb[0].mxu0 %v800
        %v839 = vpop.f32.mrb[0].mxu0
        %v840 = vadd.f32 0.0, %v839
        %v841 = vpop.f32.mrb[0].mxu0
        %v842 = vpop.f32.mrb[0].mxu0
        %v843 = vpop.f32.mrb[0].mxu0
        %844 = vdwg.mxu0
        %vm845 = vcmask 130048
        %v846 = vsel %vm845, %v840, -inf
        %847 = vmax.xlane.f32.xlu0 %v846
        %v848 = vpop.xlane.xlu0 %847
        %v849 = vsub.f32 %v840, %v848
        %v850 = vmul.f32 %v849, 1.442695
        %v851 = vpow.pop %v850
        %v852 = vsel %vm845, %v851, 0.0
        %853 = vadd.xlane.f32.xlu0 %v852
        %v854 = vpop.xlane.xlu0 %853
        %v855 = vrcp.pop %v854
        %v856 = vmul.f32 %v851, %v855
        %v857 = vpack.c.bf16 %v856, %v856
        %v858 = vpack.c.bf16 %v793, %v790
        %v860 = vsel %vm845, %v857, 0
        %862 = vmatprep.subr.bf16.mxu0 0
        %863 = vmatpush1.bf16.msra.mxu0 %v858
        %864 = vmatprep.subr.bf16.mxu0 0
        %865 = vmatpush1.bf16.msra.mxu0 0
        %866 = vmatprep.subr.bf16.mxu0 0
        %867 = vmatpush1.bf16.msra.mxu0 0
        %868 = vmatprep.subr.bf16.mxu0 0
        %869 = vmatpush1.bf16.msra.mxu0 0
        %870 = vmatprep.subr.bf16.mxu0 0
        %871 = vmatpush1.bf16.msra.mxu0 0
        %872 = vmatprep.subr.bf16.mxu0 0
        %873 = vmatpush1.bf16.msra.mxu0 0
        %874 = vmatprep.subr.bf16.mxu0 0
        %875 = vmatpush1.bf16.msra.mxu0 0
        %876 = vmatprep.subr.bf16.mxu0 0
        %877 = vmatpush1.bf16.msra.mxu0 0
        %878 = vmatprep.subr.bf16.mxu0 0
        %879 = vmatpush1.bf16.msra.mxu0 0
        %880 = vmatprep.subr.bf16.mxu0 0
        %881 = vmatpush1.bf16.msra.mxu0 0
        %882 = vmatprep.subr.bf16.mxu0 0
        %883 = vmatpush1.bf16.msra.mxu0 0
        %884 = vmatprep.subr.bf16.mxu0 0
        %885 = vmatpush1.bf16.msra.mxu0 0
        %886 = vmatprep.subr.bf16.mxu0 0
        %887 = vmatpush1.bf16.msra.mxu0 0
        %888 = vmatprep.subr.bf16.mxu0 0
        %889 = vmatpush1.bf16.msra.mxu0 0
        %890 = vmatprep.subr.bf16.mxu0 0
        %891 = vmatpush1.bf16.msra.mxu0 0
        %892 = vmatprep.subr.bf16.mxu0 0
        %893 = vmatpush1.bf16.msra.mxu0 0
        %894 = vmatprep.mubr.bf16.mxu0 0
        %895 = vmatmul.mubr.bf16.gmra.mrb[0].mxu0 %v860
        %v896 = vpop.f32.mrb[0].mxu0
        %v897 = vadd.f32 0.0, %v896
        %v898 = vpop.f32.mrb[0].mxu0
        %v899 = vpop.f32.mrb[0].mxu0
        %v900 = vpop.f32.mrb[0].mxu0
        %901 = vdwg.mxu0
        %v902 = vld [vmem:[#allocation2] sm:$0xff]
        %v903 = vpack.c.bf16 %v897, %v897
        %v904 = vld [vmem:[%s572] sm:$0xf]
        %v906 = vsel %vm798, %v903, 0
        %vm908 = vcmask 1043456
        %v910 = vsel %vm908, %v904, 0
        %912 = vmatprep.subr.bf16.mxu0 0
        %913 = vmatpush1.bf16.msra.mxu0 %v910
        %914 = vmatprep.subr.bf16.mxu0 0
        %915 = vmatpush1.bf16.msra.mxu0 0
        %916 = vmatprep.subr.bf16.mxu0 0
        %917 = vmatpush1.bf16.msra.mxu0 0
        %918 = vmatprep.subr.bf16.mxu0 0
        %919 = vmatpush1.bf16.msra.mxu0 0
        %920 = vmatprep.subr.bf16.mxu0 0
        %921 = vmatpush1.bf16.msra.mxu0 0
        %922 = vmatprep.subr.bf16.mxu0 0
        %923 = vmatpush1.bf16.msra.mxu0 0
        %924 = vmatprep.subr.bf16.mxu0 0
        %925 = vmatpush1.bf16.msra.mxu0 0
        %926 = vmatprep.subr.bf16.mxu0 0
        %927 = vmatpush1.bf16.msra.mxu0 0
        %928 = vmatprep.subr.bf16.mxu0 0
        %929 = vmatpush1.bf16.msra.mxu0 0
        %930 = vmatprep.subr.bf16.mxu0 0
        %931 = vmatpush1.bf16.msra.mxu0 0
        %932 = vmatprep.subr.bf16.mxu0 0
        %933 = vmatpush1.bf16.msra.mxu0 0
        %934 = vmatprep.subr.bf16.mxu0 0
        %935 = vmatpush1.bf16.msra.mxu0 0
        %936 = vmatprep.subr.bf16.mxu0 0
        %937 = vmatpush1.bf16.msra.mxu0 0
        %938 = vmatprep.subr.bf16.mxu0 0
        %939 = vmatpush1.bf16.msra.mxu0 0
        %940 = vmatprep.subr.bf16.mxu0 0
        %941 = vmatpush1.bf16.msra.mxu0 0
        %942 = vmatprep.subr.bf16.mxu0 0
        %943 = vmatpush1.bf16.msra.mxu0 0
        %944 = vmatprep.mubr.bf16.mxu0 0
        %945 = vmatmul.mubr.bf16.gmra.mrb[0].mxu0 %v906
        %v946 = vpop.f32.mrb[0].mxu0
        %v947 = vadd.f32 0.0, %v946
        %v948 = vpop.f32.mrb[0].mxu0
        %v949 = vpop.f32.mrb[0].mxu0
        %v950 = vpop.f32.mrb[0].mxu0
        %951 = vdwg.mxu0
        %v952 = vadd.f32 %v902, %v947
        %953 = vst.msk [vmem:[#allocation2] sm:$0xff] %vm608, %v952
        %p954 = scmp.eq.s32.totalorder %s32, 3
        // Predicated region
        $region69: #{multi_headed_attention.1} parent=63 // pred_check
          %p955 = pneg %p954
        $region70: #{multi_headed_attention.1} parent=63 // pred_check_branch
          %957 = sbr.rel (%p955) target = $region72
        $region71: #{multi_headed_attention.1} parent=63 // pred_region
          %v958 = vld [vmem:[#allocation2] sm:$0xff]
          %v959 = vld [vmem:[%s10] sm:$0x1]
          %v961 = vlaneseq
          %v962 = vshrl.u32 %v961, 7
          %v963 = vsub.s32 0, %v962
          %v964 = vrot.slane %v959, %v963
          %v966 = vadd.f32 %v958, %v964
          %967 = vst.msk [vmem:[%s527] sm:$0xff] %vm608, %v966
        $region72: #{multi_headed_attention.1} parent=63 // pred_fallthru
          _
        %s968 = sand.u32 %s337, 1
        %s969 = scalar_lea.sflag [#allocation4], %s968
        %s970 = sand.u32 %s337, 1
        %s971 = smul.addr %s970, 8
        %s972 = scalar_lea.vmem [#allocation3], %s971
        // Predicated region
        $region73: #{multi_headed_attention.1} parent=63 // pred_check
          %p973 = pneg %p347
        $region74: #{multi_headed_attention.1} parent=63 // pred_check_branch
          %975 = sbr.rel (%p973) target = $region76
        $region75: #{multi_headed_attention.1} parent=63 // pred_region
          %s977 = ssub.s32 128, 128
          %978 = vsyncadd %s969, %s977
          %s979 = sadd.s32 %s31, %s30
          %s980 = smul.addr %s979, 128
          %s981 = scalar_lea.hbm %s11, %s980
          %s983 = sshll.u32 %s972, 4
          %s984 = int_to_ptr.vmem [resolvable:$true] %s983
          %986 = dma.vmem_to_hbm [thread:$0]  %s984, 128, %s981, %s969
        $region76: #{multi_headed_attention.1} parent=63 // pred_fallthru
          _
      $region64: #{multi_headed_attention.1} parent=5 // pred_fallthru
        _
      %p987 = scmp.le.s32.totalorder 2, %s20
      // Predicated region
      $region77: #{multi_headed_attention.1} parent=5 // pred_check
        %p988 = pneg %p987
      $region78: #{multi_headed_attention.1} parent=5 // pred_check_branch
        %990 = sbr.rel (%p988) target = $region80
      $region79: #{multi_headed_attention.1} parent=5 // pred_region
        %s991 = ssub.s32 %s20, 2
        // Predicated region
        $region81: #{multi_headed_attention.1} parent=79 // pred_check
          %p992 = pneg %p353
        $region82: #{multi_headed_attention.1} parent=79 // pred_check_branch
          %994 = sbr.rel (%p992) target = $region84
        $region83: #{multi_headed_attention.1} parent=79 // pred_region
          %s995 = sand.u32 %s338, 1
          %s996 = scalar_lea.sflag [#allocation4], %s995
          %s997 = sand.u32 %s338, 1
          %s998 = smul.addr %s997, 8
          %s999 = scalar_lea.vmem [#allocation3], %s998
          %1000 = dma.done %s996, 128
        $region84: #{multi_headed_attention.1} parent=79 // pred_fallthru
          _
      $region80: #{multi_headed_attention.1} parent=5 // pred_fallthru
        _
    $region6: #{multi_headed_attention.1} parent=1 // loop_footer
      %s24 = sadd.s32 1, %s20
    $region7: #{multi_headed_attention.1} parent=1 // loop_footer_branch
      %19 = sbr.rel target = $region3
    $region8: #{multi_headed_attention.1} parent=1 // loop_exit
      _
    %1001 = vsyncpa [#allocation4], 1
    %s1002 = scalar_lea.sflag [#allocation4], 1
    %1003 = vsyncpa %s1002, 1

</llo_original>
